<compile_context>
chip_gen: v7x
topology: tpu7x:2x2x1
jax: 0.10.0
libtpu: 0.0.40
codegen_flags: <defaults>
</compile_context>

<pallas_src>
import functools

import jax
import jax.numpy as jnp
from jax.experimental import pallas as pl
from jax.experimental.pallas import tpu as pltpu

MLP_INPUT_SIZE = 32
MLP_HIDDEN_SIZE = 32
LN_EPS = 1e-5


def _act(x):
    # config.NET_MLP['mlp_hidden_act'] == 'relu'
    return jnp.maximum(x, 0.0)


def _mlp_kernel(x_ref, w2_ref, b2_ref, w3e_ref, b3e_ref, o_ref):
    # x_ref: (tm, D) VMEM, w2_ref: (D, H), b2_ref/w3e_ref: (1, H) VMEM,
    # b3e_ref: (1, 1) SMEM scalar, o_ref: (1, 1, tm) lane-dense output block.
    x = x_ref[...].astype(jnp.float32)

    # act(x.transpose(-2,-1)).transpose(-2,-1) == act(x)  (elementwise)
    x = _act(x)

    # fc2 + act  -- MXU matmul on the hot path
    h = jnp.dot(x, w2_ref[...], preferred_element_type=jnp.float32) + b2_ref[...]
    h = _act(h)

    # LayerNorm statistics over the hidden (last) axis; biased variance like torch.
    mean = jnp.mean(h, axis=-1, keepdims=True)
    c = h - mean
    var = jnp.mean(c * c, axis=-1, keepdims=True)
    hn = c * jax.lax.rsqrt(var + LN_EPS)

    # LN affine + fc3 folded: row = hn @ (gamma*w3) + (beta.w3 + b3)
    # N=1 "matmul" as VPU multiply + lane reduce (keeps the MXU/MRF path free).
    row = jnp.sum(hn * w3e_ref[...], axis=-1) + b3e_ref[0, 0]      # (tm,)

    # Lane-dense store of the whole tile's outputs.
    o_ref[...] = row.reshape(o_ref.shape).astype(o_ref.dtype)


@functools.partial(jax.jit, static_argnames=("tm",))
def mlp_no_attention_lengthen(x, params, *, tm=2048):
    """x: (B, S, D) float (f32 or bf16). Returns (B,) if S == 1 else (B, S)."""
    w2, b2, gamma, beta, w3, b3 = params
    B, S, D = x.shape
    H = w2.shape[1]
    M = B * S

    # Fold LayerNorm affine + fc3 bias into fc3 (host-side, H-sized => free).
    w3_flat = w3.reshape(-1)
    w3_eff = (gamma.reshape(-1) * w3_flat).reshape(1, H).astype(jnp.float32)
    b3_eff = (jnp.sum(beta.reshape(-1) * w3_flat) + b3.reshape(())).reshape(1, 1)
    b3_eff = b3_eff.astype(jnp.float32)

    # Row tiling: explicit tile so the x DMA pipelines; clamp for tiny inputs.
    if M <= tm:
        tm_eff = M                      # single block == full dims (always legal)
    else:
        tm_eff = int(tm)
        assert tm_eff % 8 == 0, "tm must be a multiple of 8 (sublane constraint)"
    num_tiles = pl.cdiv(M, tm_eff)      # last tile may be ragged; Pallas pads reads

    x2 = x.reshape(M, D)

    out = pl.pallas_call(
        _mlp_kernel,
        out_shape=jax.ShapeDtypeStruct((num_tiles, 1, tm_eff), jnp.float32),
        grid_spec=pltpu.PrefetchScalarGridSpec(
            num_scalar_prefetch=0,
            grid=(num_tiles,),
            in_specs=[
                pl.BlockSpec((tm_eff, D), lambda i: (i, 0)),          # x rows (streamed)
                pl.BlockSpec((D, H), lambda i: (0, 0)),               # fc2 weight (resident)
                pl.BlockSpec((1, H), lambda i: (0, 0)),               # fc2 bias (resident)
                pl.BlockSpec((1, H), lambda i: (0, 0)),               # gamma*w3 (resident)
                pl.BlockSpec(memory_space=pltpu.MemorySpace.SMEM),    # folded fc3 bias scalar
            ],
            out_specs=pl.BlockSpec((1, 1, tm_eff), lambda i: (i, 0, 0)),  # lane-dense row
        ),
        compiler_params=pltpu.CompilerParams(
            dimension_semantics=("parallel",)),
        cost_estimate=pl.CostEstimate(
            flops=2 * M * D * H + 12 * M * H,
            transcendentals=M,
            bytes_accessed=M * D * x.dtype.itemsize + M * 4 + (D * H + 3 * H + 1) * 4),
    )(x2, w2, b2, w3_eff, b3_eff)

    out = out.reshape(num_tiles * tm_eff)[:M]   # drop padded rows of the ragged tile
    out = out.reshape(B, S)                     # squeeze(-1) on the fc3 output
    if S == 1:                                  # second squeeze(-1) only if singleton
        out = out.reshape(B)
    return out


def init_params(key, input_size=MLP_INPUT_SIZE, hidden_size=MLP_HIDDEN_SIZE):
    """Deterministic synthetic parameters (same shapes as the torch module)."""
    k2w, k2b, k3w, k3b = jax.random.split(key, 4)
    bound2 = 1.0 / jnp.sqrt(input_size)
    bound3 = 1.0 / jnp.sqrt(hidden_size)
    w2 = jax.random.uniform(k2w, (input_size, hidden_size), jnp.float32, -bound2, bound2)
    b2 = jax.random.uniform(k2b, (1, hidden_size), jnp.float32, -bound2, bound2)
    gamma = jnp.ones((1, hidden_size), jnp.float32)   # LayerNorm weight init
    beta = jnp.zeros((1, hidden_size), jnp.float32)   # LayerNorm bias init
    w3 = jax.random.uniform(k3w, (hidden_size, 1), jnp.float32, -bound3, bound3)
    b3 = jax.random.uniform(k3b, (1, 1), jnp.float32, -bound3, bound3)
    return (w2, b2, gamma, beta, w3, b3)


def reference_forward(x, params):
    """Pure-JAX reference of the torch forward for a correctness check."""
    w2, b2, gamma, beta, w3, b3 = params
    h = _act(x)
    h = _act(h @ w2 + b2)
    mean = jnp.mean(h, axis=-1, keepdims=True)
    var = jnp.mean((h - mean) ** 2, axis=-1, keepdims=True)
    hn = (h - mean) / jnp.sqrt(var + LN_EPS) * gamma + beta
    out = (hn @ w3 + b3)[..., 0]
    if out.shape[-1] == 1:
        out = out[..., 0]
    return out


# TODO(synk): the "pack 4 rows per 128-lane vreg with block-diagonal W2" layout from the
# perf review is not implemented; the op is HBM-read bound so its win is mostly VMEM/VPU
# occupancy, not bandwidth.

if __name__ == "__main__":
    key = jax.random.PRNGKey(0)
    kx_small, kx_big, kp = jax.random.split(key, 3)

    params = init_params(kp)

    # Small embedded-sequence input (B, S, D) -- single-tile path.
    B, S, D = 2, 4, MLP_INPUT_SIZE
    x_small = jax.random.normal(kx_small, (B, S, D), jnp.float32)
    out_small = jax.block_until_ready(mlp_no_attention_lengthen(x_small, params))
    ref_small = reference_forward(x_small, params)
    assert out_small.shape == ref_small.shape, (out_small.shape, ref_small.shape)
    assert jnp.allclose(out_small, ref_small, atol=1e-4, rtol=1e-4), \
        jnp.max(jnp.abs(out_small - ref_small))

    # Tiled + ragged path (M = 2560 rows, tm = 1024 -> 3 grid steps, last one padded).
    x_big = jax.random.normal(kx_big, (64, 40, MLP_INPUT_SIZE), jnp.float32)
    out_big = jax.block_until_ready(mlp_no_attention_lengthen(x_big, params, tm=1024))
    ref_big = reference_forward(x_big, params)
    assert out_big.shape == ref_big.shape, (out_big.shape, ref_big.shape)
    assert jnp.allclose(out_big, ref_big, atol=1e-4, rtol=1e-4), \
        jnp.max(jnp.abs(out_big - ref_big))

    print("KERNEL_OK")
</pallas_src>

<mosaic_0001>
module attributes {stable_mosaic.version = 11 : i64} {
  func.func @_mlp_kernel(%arg0: i32, %arg1: memref<8x32xf32, #tpu.memory_space<vmem>>, %arg2: memref<32x32xf32, #tpu.memory_space<vmem>>, %arg3: memref<1x32xf32, #tpu.memory_space<vmem>>, %arg4: memref<1x32xf32, #tpu.memory_space<vmem>>, %arg5: memref<1x1xf32, #tpu.memory_space<smem>>, %arg6: memref<1x1x8xf32, #tpu.memory_space<vmem>>) attributes {dimension_semantics = [#tpu.dimension_semantics<parallel>], iteration_bounds = array<i64: 1>, scalar_prefetch = 0 : i64, scratch_operands = 0 : i64, tpu.core_type = #tpu.core_type<tc>, window_params = [{transform_indices = @transform_0, window_bounds = array<i64: 8, 32>}, {pipeline_mode = #tpu.pipeline_mode<synchronous>, transform_indices = @transform_1, window_bounds = array<i64: 32, 32>}, {pipeline_mode = #tpu.pipeline_mode<synchronous>, transform_indices = @transform_2, window_bounds = array<i64: 1, 32>}, {pipeline_mode = #tpu.pipeline_mode<synchronous>, transform_indices = @transform_3, window_bounds = array<i64: 1, 32>}, {transform_indices = @transform_4, window_bounds = array<i64: 1, 1>}, {transform_indices = @transform_5, window_bounds = array<i64: 1, 1, 8>}]} {
    %c0 = arith.constant 0 : index
    %c0_0 = arith.constant 0 : index
    %0 = vector.load %arg1[%c0, %c0_0] : memref<8x32xf32, #tpu.memory_space<vmem>>, vector<8x32xf32>
    %cst = arith.constant 0.000000e+00 : f32
    %1 = vector.broadcast %cst : f32 to vector<8x32xf32>
    %2 = arith.maximumf %0, %1 : vector<8x32xf32>
    %c0_1 = arith.constant 0 : index
    %c0_2 = arith.constant 0 : index
    %3 = vector.load %arg2[%c0_1, %c0_2] : memref<32x32xf32, #tpu.memory_space<vmem>>, vector<32x32xf32>
    %cst_3 = arith.constant dense<0.000000e+00> : vector<8x32xf32>
    %4 = tpu.matmul %2, %3, %cst_3 {dimension_numbers = #tpu.dot_dimension_numbers<[1], [0], [0], [1], [0, 0, 1, 1], [], []>} : vector<8x32xf32>, vector<32x32xf32>, vector<8x32xf32> -> vector<8x32xf32>
    %c0_4 = arith.constant 0 : index
    %c0_5 = arith.constant 0 : index
    %5 = vector.load %arg3[%c0_4, %c0_5] : memref<1x32xf32, #tpu.memory_space<vmem>>, vector<1x32xf32>
    %6 = vector.broadcast %5 : vector<1x32xf32> to vector<8x32xf32>
    %7 = arith.addf %4, %6 : vector<8x32xf32>
    %cst_6 = arith.constant 0.000000e+00 : f32
    %8 = vector.broadcast %cst_6 : f32 to vector<8x32xf32>
    %9 = arith.maximumf %7, %8 : vector<8x32xf32>
    %cst_7 = arith.constant dense<0.000000e+00> : vector<8xf32>
    %10 = vector.multi_reduction <add>, %9, %cst_7 [1] : vector<8x32xf32> to vector<8xf32>
    %11 = vector.shape_cast %10 : vector<8xf32> to vector<8x1xf32>
    %cst_8 = arith.constant 3.200000e+01 : f32
    %12 = vector.broadcast %cst_8 : f32 to vector<8x1xf32>
    %13 = arith.divf %11, %12 : vector<8x1xf32>
    %14 = vector.broadcast %13 : vector<8x1xf32> to vector<8x32xf32>
    %15 = arith.subf %9, %14 : vector<8x32xf32>
    %16 = arith.mulf %15, %15 : vector<8x32xf32>
    %cst_9 = arith.constant dense<0.000000e+00> : vector<8xf32>
    %17 = vector.multi_reduction <add>, %16, %cst_9 [1] : vector<8x32xf32> to vector<8xf32>
    %18 = vector.shape_cast %17 : vector<8xf32> to vector<8x1xf32>
    %cst_10 = arith.constant 3.200000e+01 : f32
    %19 = vector.broadcast %cst_10 : f32 to vector<8x1xf32>
    %20 = arith.divf %18, %19 : vector<8x1xf32>
    %cst_11 = arith.constant 9.99999974E-6 : f32
    %21 = vector.broadcast %cst_11 : f32 to vector<8x1xf32>
    %22 = arith.addf %20, %21 : vector<8x1xf32>
    %23 = math.rsqrt %22 : vector<8x1xf32>
    %24 = vector.broadcast %23 : vector<8x1xf32> to vector<8x32xf32>
    %25 = arith.mulf %15, %24 : vector<8x32xf32>
    %c0_12 = arith.constant 0 : index
    %c0_13 = arith.constant 0 : index
    %26 = vector.load %arg4[%c0_12, %c0_13] : memref<1x32xf32, #tpu.memory_space<vmem>>, vector<1x32xf32>
    %27 = vector.broadcast %26 : vector<1x32xf32> to vector<8x32xf32>
    %28 = arith.mulf %25, %27 : vector<8x32xf32>
    %cst_14 = arith.constant dense<0.000000e+00> : vector<8xf32>
    %29 = vector.multi_reduction <add>, %28, %cst_14 [1] : vector<8x32xf32> to vector<8xf32>
    %c0_15 = arith.constant 0 : index
    %c0_16 = arith.constant 0 : index
    %30 = memref.load %arg5[%c0_15, %c0_16] : memref<1x1xf32, #tpu.memory_space<smem>>
    %31 = vector.broadcast %30 : f32 to vector<8xf32>
    %32 = arith.addf %29, %31 : vector<8xf32>
    %33 = vector.shape_cast %32 : vector<8xf32> to vector<1x1x8xf32>
    %c0_17 = arith.constant 0 : index
    %c0_18 = arith.constant 0 : index
    %c0_19 = arith.constant 0 : index
    %34 = vector.load %arg6[%c0_17, %c0_18, %c0_19] : memref<1x1x8xf32, #tpu.memory_space<vmem>>, vector<1x1x8xf32>
    tpu.vector_store %arg6[%c0_17, %c0_18, %c0_19], %33 {strides = array<i32>} : memref<1x1x8xf32, #tpu.memory_space<vmem>>, vector<1x1x8xf32>,
    return
  }
  func.func @transform_0(%arg0: i32) -> (i32, i32) {
    %c0_i32 = arith.constant 0 : i32
    %c0_i32_0 = arith.constant 0 : i32
    return %arg0, %c0_i32 : i32, i32
  }
  func.func @transform_1(%arg0: i32) -> (i32, i32) {
    %c0_i32 = arith.constant 0 : i32
    %c0_i32_0 = arith.constant 0 : i32
    %c0_i32_1 = arith.constant 0 : i32
    return %c0_i32, %c0_i32_0 : i32, i32
  }
  func.func @transform_2(%arg0: i32) -> (i32, i32) {
    %c0_i32 = arith.constant 0 : i32
    %c0_i32_0 = arith.constant 0 : i32
    %c0_i32_1 = arith.constant 0 : i32
    return %c0_i32, %c0_i32_0 : i32, i32
  }
  func.func @transform_3(%arg0: i32) -> (i32, i32) {
    %c0_i32 = arith.constant 0 : i32
    %c0_i32_0 = arith.constant 0 : i32
    %c0_i32_1 = arith.constant 0 : i32
    return %c0_i32, %c0_i32_0 : i32, i32
  }
  func.func @transform_4(%arg0: i32) -> (i32, i32) {
    %c0_i32 = arith.constant 0 : i32
    %c0_i32_0 = arith.constant 0 : i32
    %c0_i32_1 = arith.constant 0 : i32
    return %c0_i32, %c0_i32_0 : i32, i32
  }
  func.func @transform_5(%arg0: i32) -> (i32, i32, i32) {
    %c0_i32 = arith.constant 0 : i32
    %c0_i32_0 = arith.constant 0 : i32
    %c0_i32_1 = arith.constant 0 : i32
    return %arg0, %c0_i32, %c0_i32_0 : i32, i32, i32
  }
}

</mosaic_0001>

<llo_original>
// kernel: mlp_no_attention_lengthen.1
$region0: #{mlp_no_attention_lengthen.1}
  #allocation0 [shape = 'u32[]', space=smem, size = 0x4, offset = 0x4, fixed_abs, tag = 'smem constant byte address 0x4 - core index']
  #allocation1 [shape = 'u32[144,128]{1,0:T(1,128)}', space=vmem, size = 0x12000, scoped, tag = 'internal scratch']
  #allocation2 [shape = 'f32[1,1]{1,0:T(1,128)S(6)}', space=smem, size = 0x200, scoped, tag = 'scoped memory for mlp_no_attention_lengthen.1']
  %s0 = inlined_call_operand.vmem [shape: f32[8,32], index: 0, kind: input, shape index: {}]
  %s1 = inlined_call_operand.hbm [shape: f32[32,32], index: 1, kind: input, shape index: {}]
  %s2 = inlined_call_operand.vmem [shape: f32[1,32], index: 2, kind: input, shape index: {}]
  %s3 = inlined_call_operand.vmem [shape: f32[1,32], index: 3, kind: input, shape index: {}]
  %s4 = inlined_call_operand.<no memory space> [shape: f32[1,1], index: 4, kind: input, shape index: {}]
  %s5 = inlined_call_operand.vmem [shape: f32[1,1,8], index: 5, kind: output, shape index: {}]
  %s6 = sld [smem:[#allocation0]]
  $region34: #{mlp_no_attention_lengthen.1} parent=0
    _
  %s8 = ssub.s32 1, %s6
  %s9 = scalar_select 0, %s8, %s6
  %10 = sst [smem:[#allocation2]] %s4
  $region1: #{mlp_no_attention_lengthen.1} parent=0
    #allocation3 [shape = 'u8[16384]{0}', space=vmem, size = 0x4000, scoped, tag = 'input window, operand 1, single buffered']
    #allocation4 [shape = 's32[1]{0}', space=sflag, size = 0x4, scoped, tag = 'scoped memory for mlp_no_attention_lengthen.1']
    %11 = vsyncpa [#allocation4], 0
    // Predicated region
    $region2: #{mlp_no_attention_lengthen.1} parent=1 // pred_check
      _
    $region3: #{mlp_no_attention_lengthen.1} parent=1 // pred_check_branch
      %13 = sbr.rel (0) target = $region5
    $region4: #{mlp_no_attention_lengthen.1} parent=1 // pred_region
      _
    $region5: #{mlp_no_attention_lengthen.1} parent=1 // pred_fallthru
      _
    // Predicated region
    $region6: #{mlp_no_attention_lengthen.1} parent=1 // pred_check
      _
    $region7: #{mlp_no_attention_lengthen.1} parent=1 // pred_check_branch
      %15 = sbr.rel (0) target = $region9
    $region8: #{mlp_no_attention_lengthen.1} parent=1 // pred_region
      %s17 = ssub.s32 512, 512
      %18 = vsyncadd [#allocation4], %s17
      %s19 = sshll.u32 [#allocation3], 4
      %s20 = int_to_ptr.vmem [resolvable:$true] %s19
      %25 = dma.hbm_to_vmem [thread:$0]  %s1, 512, %s20, [#allocation4], 128, 128, 8
    $region9: #{mlp_no_attention_lengthen.1} parent=1 // pred_fallthru
      _
    // Predicated region
    $region10: #{mlp_no_attention_lengthen.1} parent=1 // pred_check
      _
    $region11: #{mlp_no_attention_lengthen.1} parent=1 // pred_check_branch
      %27 = sbr.rel (0) target = $region13
    $region12: #{mlp_no_attention_lengthen.1} parent=1 // pred_region
      _
    $region13: #{mlp_no_attention_lengthen.1} parent=1 // pred_fallthru
      _
    // Predicated region
    $region14: #{mlp_no_attention_lengthen.1} parent=1 // pred_check
      _
    $region15: #{mlp_no_attention_lengthen.1} parent=1 // pred_check_branch
      %29 = sbr.rel (0) target = $region17
    $region16: #{mlp_no_attention_lengthen.1} parent=1 // pred_region
      _
    $region17: #{mlp_no_attention_lengthen.1} parent=1 // pred_fallthru
      _
    // Predicated region
    $region18: #{mlp_no_attention_lengthen.1} parent=1 // pred_check
      _
    $region19: #{mlp_no_attention_lengthen.1} parent=1 // pred_check_branch
      %31 = sbr.rel (0) target = $region21
    $region20: #{mlp_no_attention_lengthen.1} parent=1 // pred_region
      _
    $region21: #{mlp_no_attention_lengthen.1} parent=1 // pred_fallthru
      _
    // Predicated region
    $region22: #{mlp_no_attention_lengthen.1} parent=1 // pred_check
      _
    $region23: #{mlp_no_attention_lengthen.1} parent=1 // pred_check_branch
      %33 = sbr.rel (0) target = $region25
    $region24: #{mlp_no_attention_lengthen.1} parent=1 // pred_region
      %34 = dma.done [#allocation4], 512
    $region25: #{mlp_no_attention_lengthen.1} parent=1 // pred_fallthru
      _
    %v35 = vld [vmem:[%s0] sm:$0xff]
    %v36 = vmax.f32 %v35, 0.0
    %v37 = vld [vmem:[#allocation3] sm:$0xff]
    %v38 = vld [vmem:[#allocation3 + $0x8] sm:$0xff]
    %v39 = vld [vmem:[#allocation3 + $0x10] sm:$0xff]
    %v40 = vld [vmem:[#allocation3 + $0x18] sm:$0xff]
    %v41 = vld [vmem:[%s2] sm:$0x1]
    %v43 = vlaneseq
    %v44 = vshrl.u32 %v43, 7
    %v45 = vsub.s32 0, %v44
    %v46 = vrot.slane %v41, %v45
    %vm48 = vcmask 261120
    %v50 = vsel %vm48, %v36, 0
    %52 = vmatprep.subr.mxu0 0.0
    %53 = vmatpush1.msra.mxu0 %v37
    %54 = vmatprep.subr.mxu0 0.0
    %55 = vmatpush1.msra.mxu0 %v38
    %56 = vmatprep.subr.mxu0 0.0
    %57 = vmatpush1.msra.mxu0 %v39
    %58 = vmatprep.subr.mxu0 0.0
    %59 = vmatpush1.msra.mxu0 %v40
    %60 = vmatprep.subr.mxu0 0.0
    %61 = vmatpush1.msra.mxu0 0.0
    %62 = vmatprep.subr.mxu0 0.0
    %63 = vmatpush1.msra.mxu0 0.0
    %64 = vmatprep.subr.mxu0 0.0
    %65 = vmatpush1.msra.mxu0 0.0
    %66 = vmatprep.subr.mxu0 0.0
    %67 = vmatpush1.msra.mxu0 0.0
    %68 = vmatprep.subr.mxu0 0.0
    %69 = vmatpush1.msra.mxu0 0.0
    %70 = vmatprep.subr.mxu0 0.0
    %71 = vmatpush1.msra.mxu0 0.0
    %72 = vmatprep.subr.mxu0 0.0
    %73 = vmatpush1.msra.mxu0 0.0
    %74 = vmatprep.subr.mxu0 0.0
    %75 = vmatpush1.msra.mxu0 0.0
    %76 = vmatprep.subr.mxu0 0.0
    %77 = vmatpush1.msra.mxu0 0.0
    %78 = vmatprep.subr.mxu0 0.0
    %79 = vmatpush1.msra.mxu0 0.0
    %80 = vmatprep.subr.mxu0 0.0
    %81 = vmatpush1.msra.mxu0 0.0
    %82 = vmatprep.subr.mxu0 0.0
    %83 = vmatpush1.msra.mxu0 0.0
    %84 = vmatprep.subr.mxu0 0.0
    %85 = vmatpush1.msra.mxu0 0.0
    %86 = vmatprep.subr.mxu0 0.0
    %87 = vmatpush1.msra.mxu0 0.0
    %88 = vmatprep.subr.mxu0 0.0
    %89 = vmatpush1.msra.mxu0 0.0
    %90 = vmatprep.subr.mxu0 0.0
    %91 = vmatpush1.msra.mxu0 0.0
    %92 = vmatprep.subr.mxu0 0.0
    %93 = vmatpush1.msra.mxu0 0.0
    %94 = vmatprep.subr.mxu0 0.0
    %95 = vmatpush1.msra.mxu0 0.0
    %96 = vmatprep.subr.mxu0 0.0
    %97 = vmatpush1.msra.mxu0 0.0
    %98 = vmatprep.subr.mxu0 0.0
    %99 = vmatpush1.msra.mxu0 0.0
    %100 = vmatprep.subr.mxu0 0.0
    %101 = vmatpush1.msra.mxu0 0.0
    %102 = vmatprep.subr.mxu0 0.0
    %103 = vmatpush1.msra.mxu0 0.0
    %104 = vmatprep.subr.mxu0 0.0
    %105 = vmatpush1.msra.mxu0 0.0
    %106 = vmatprep.subr.mxu0 0.0
    %107 = vmatpush1.msra.mxu0 0.0
    %108 = vmatprep.subr.mxu0 0.0
    %109 = vmatpush1.msra.mxu0 0.0
    %110 = vmatprep.subr.mxu0 0.0
    %111 = vmatpush1.msra.mxu0 0.0
    %112 = vmatprep.subr.mxu0 0.0
    %113 = vmatpush1.msra.mxu0 0.0
    %114 = vmatprep.subr.mxu0 0.0
    %115 = vmatpush1.msra.mxu0 0.0
    %116 = vmatprep.mubr.f32.mxu0 0.0
    %117 = vmatmul.mubr.f32.gmra.mrb[0].mxu0 %v50
    %v118 = vpop.f32.mrb[0].mxu0
    %v119 = vadd.f32 %v46, %v118
    %v120 = vpop.f32.mrb[0].mxu0
    %121 = vdwg.mxu0
    %v122 = vmax.f32 %v119, 0.0
    %v123 = vsel %vm48, %v122, 0.0
    %124 = vadd.xlane.f32.xlu0 %v123
    %v125 = vpop.xlane.xlu0 %124
    %v126 = vrcp.pop 32.0
    %v127 = vmul.f32 %v125, %v126
    %v128 = vsub.f32 %v122, %v127
    %v129 = vmul.f32 %v128, %v128
    %v130 = vsel %vm48, %v129, 0.0
    %131 = vadd.xlane.f32.xlu0 %v130
    %v132 = vpop.xlane.xlu0 %131
    %v133 = vmul.f32 %v132, %v126
    %v134 = vadd.f32 %v133, 1e-05
    %v135 = vrsqrt.pop %v134
    %v136 = vmul.f32 %v128, %v135
    %v137 = vld [vmem:[%s3] sm:$0x1]
    %v139 = vlaneseq
    %v140 = vshrl.u32 %v139, 7
    %v141 = vsub.s32 0, %v140
    %v142 = vrot.slane %v137, %v141
    %v144 = vmul.f32 %v136, %v142
    %v145 = vsel %vm48, %v144, 0.0
    %146 = vadd.xlane.f32.xlu0 %v145
    %v147 = vpop.xlane.xlu0 %146
    %s148 = sld [smem:[#allocation2]]
    %v149 = vstv %s148
    %v150 = vadd.f32 %v147, %v149
    %v152 = vlaneseq
    %v153 = vand.u32 %v152, 127
    %v154 = vlaneseq
    %v155 = vshrl.u32 %v154, 7
    %v156 = vsub.s32 %v153, %v155
    %v157 = vrot.slane %v150, %v156
    %vm159 = vcmask 57344
    %160 = vst.msk [vmem:[%s5] sm:$0x1] %vm159, %v157
    // Predicated region
    $region26: #{mlp_no_attention_lengthen.1} parent=1 // pred_check
      _
    $region27: #{mlp_no_attention_lengthen.1} parent=1 // pred_check_branch
      %162 = sbr.rel (0) target = $region29
    $region28: #{mlp_no_attention_lengthen.1} parent=1 // pred_region
      _
    $region29: #{mlp_no_attention_lengthen.1} parent=1 // pred_fallthru
      _
    // Predicated region
    $region30: #{mlp_no_attention_lengthen.1} parent=1 // pred_check
      _
    $region31: #{mlp_no_attention_lengthen.1} parent=1 // pred_check_branch
      %164 = sbr.rel (0) target = $region33
    $region32: #{mlp_no_attention_lengthen.1} parent=1 // pred_region
      _
    $region33: #{mlp_no_attention_lengthen.1} parent=1 // pred_fallthru
      _
    %165 = vsyncpa [#allocation4], 1

</llo_original>
